<compile_context>
chip_gen: v5e
topology: v5e:2x2
jax: 0.10.0
libtpu: 0.0.40
codegen_flags: <defaults>
</compile_context>

<pallas_src>
import math

import jax
import jax.numpy as jnp
from jax.experimental import pallas as pl
from jax.experimental.pallas import tpu as pltpu

_HALF_LOG_2PI = 0.5 * math.log(2.0 * math.pi)

_LANE_WIDTH = 1024          # lane-dense last dim (multiple of 128) -> unmasked full-width vst
_TARGET_BLOCK_ROWS = 512    # ~2 MiB per f32 tile at width 1024


def _normal_kernel(mean_ref, scale_ref, actions_ref, eps_ref,
                   sample_ref, logp_ref):
    """Fused kernel: Normal(mean, scale).sample() and .log_prob(actions).

    All refs hold one (block_rows, _LANE_WIDTH) tile resident in VMEM.
    """
    mean = mean_ref[...]
    scale = scale_ref[...]
    actions = actions_ref[...]
    eps = eps_ref[...]

    # sample = mean + scale * eps   (reparameterized standard-normal draw)
    sample_ref[...] = mean + scale * eps

    # log_prob = -0.5*z^2 - log(scale) - 0.5*log(2*pi),  z = (a - mean)/scale
    # exact reciprocal: z gets squared, so keep full precision (HBM-bound anyway).
    inv_scale = pl.reciprocal(scale, approx=False)
    z = (actions - mean) * inv_scale
    logp_ref[...] = -0.5 * (z * z) - jnp.log(scale) - _HALF_LOG_2PI


def _round_up(x, m):
    return ((x + m - 1) // m) * m


def _choose_block_rows(rows):
    if rows <= 8:
        return 8
    # At least 2 grid steps when possible (keeps both v7x TensorCores busy),
    # multiple of 8 (sublane), capped at the ~2 MiB/tile target.
    return max(8, min(_TARGET_BLOCK_ROWS, _round_up(pl.cdiv(rows, 2), 8)))


@jax.jit
def normal_sample_and_log_prob(mean, scale, actions, eps):
    """Fused Normal sample / log_prob via Pallas.

    mean, scale, actions, eps : f32 arrays of identical shape (any rank).
    returns (sample, log_prob) with the same shape/dtype as the inputs.
    """
    orig_shape = mean.shape
    dtype = mean.dtype
    n = math.prod(orig_shape)

    rows = pl.cdiv(n, _LANE_WIDTH)
    block_rows = _choose_block_rows(rows)
    padded_rows = _round_up(rows, block_rows)
    padded_n = padded_rows * _LANE_WIDTH
    pad = padded_n - n

    def _prep(x, fill):
        x = jnp.ravel(x)
        if pad:
            x = jnp.concatenate([x, jnp.full((pad,), fill, dtype=dtype)])
        return x.reshape(padded_rows, _LANE_WIDTH)

    mean2 = _prep(mean, 0.0)
    scale2 = _prep(scale, 1.0)     # padded tail: avoid div-by-zero / log(0)
    actions2 = _prep(actions, 0.0)
    eps2 = _prep(eps, 0.0)

    grid = (padded_rows // block_rows,)
    spec = pl.BlockSpec((block_rows, _LANE_WIDTH), lambda i: (i, 0))

    sample2, logp2 = pl.pallas_call(
        _normal_kernel,
        out_shape=(
            jax.ShapeDtypeStruct((padded_rows, _LANE_WIDTH), dtype),   # sample
            jax.ShapeDtypeStruct((padded_rows, _LANE_WIDTH), dtype),   # log_prob
        ),
        grid=grid,
        in_specs=[spec, spec, spec, spec],
        out_specs=(spec, spec),
        compiler_params=pltpu.CompilerParams(
            dimension_semantics=("parallel",),
            vmem_limit_bytes=48 * 1024 * 1024,
        ),
    )(mean2, scale2, actions2, eps2)

    sample = sample2.reshape(-1)[:n].reshape(orig_shape)
    logp = logp2.reshape(-1)[:n].reshape(orig_shape)
    return sample, logp


def reference_sample_and_log_prob(mean, scale, actions, eps):
    sample = mean + scale * eps
    z = (actions - mean) / scale
    logp = -0.5 * z * z - jnp.log(scale) - _HALF_LOG_2PI
    return sample, logp


if __name__ == "__main__":
    key = jax.random.PRNGKey(0)
    k_mean, k_scale, k_act, k_eps = jax.random.split(key, 4)

    batch, dim = 16, 256   # small demo shape; wrapper handles any size via padding

    # Synthetic stand-ins for the abstract forward()'s (mean, scale) outputs.
    mean = jax.random.normal(k_mean, (batch, dim), dtype=jnp.float32)
    scale = jax.nn.softplus(jax.random.normal(k_scale, (batch, dim),
                                              dtype=jnp.float32)) + 1e-3
    actions = jax.random.normal(k_act, (batch, dim), dtype=jnp.float32)
    eps = jax.random.normal(k_eps, (batch, dim), dtype=jnp.float32)

    sample, logp = normal_sample_and_log_prob(mean, scale, actions, eps)
    jax.block_until_ready((sample, logp))

    ref_sample, ref_logp = reference_sample_and_log_prob(mean, scale,
                                                         actions, eps)
    assert sample.shape == mean.shape and logp.shape == mean.shape
    assert jnp.allclose(sample, ref_sample, atol=1e-5, rtol=1e-5)
    assert jnp.allclose(logp, ref_logp, atol=1e-4, rtol=1e-4)

    print("KERNEL_OK")
</pallas_src>

<mosaic_0001>
module attributes {stable_mosaic.version = 11 : i64} {
  func.func @_normal_kernel(%arg0: i32, %arg1: memref<8x1024xf32, #tpu.memory_space<vmem>>, %arg2: memref<8x1024xf32, #tpu.memory_space<vmem>>, %arg3: memref<8x1024xf32, #tpu.memory_space<vmem>>, %arg4: memref<8x1024xf32, #tpu.memory_space<vmem>>, %arg5: memref<8x1024xf32, #tpu.memory_space<vmem>>, %arg6: memref<8x1024xf32, #tpu.memory_space<vmem>>) attributes {dimension_semantics = [#tpu.dimension_semantics<parallel>], iteration_bounds = array<i64: 1>, scalar_prefetch = 0 : i64, scratch_operands = 0 : i64, tpu.core_type = #tpu.core_type<tc>, window_params = [{transform_indices = @transform_0, window_bounds = array<i64: 8, 1024>}, {transform_indices = @transform_1, window_bounds = array<i64: 8, 1024>}, {transform_indices = @transform_2, window_bounds = array<i64: 8, 1024>}, {transform_indices = @transform_3, window_bounds = array<i64: 8, 1024>}, {transform_indices = @transform_4, window_bounds = array<i64: 8, 1024>}, {transform_indices = @transform_5, window_bounds = array<i64: 8, 1024>}]} {
    %c0 = arith.constant 0 : index
    %c0_0 = arith.constant 0 : index
    %0 = vector.load %arg1[%c0, %c0_0] : memref<8x1024xf32, #tpu.memory_space<vmem>>, vector<8x1024xf32>
    %c0_1 = arith.constant 0 : index
    %c0_2 = arith.constant 0 : index
    %1 = vector.load %arg2[%c0_1, %c0_2] : memref<8x1024xf32, #tpu.memory_space<vmem>>, vector<8x1024xf32>
    %c0_3 = arith.constant 0 : index
    %c0_4 = arith.constant 0 : index
    %2 = vector.load %arg3[%c0_3, %c0_4] : memref<8x1024xf32, #tpu.memory_space<vmem>>, vector<8x1024xf32>
    %c0_5 = arith.constant 0 : index
    %c0_6 = arith.constant 0 : index
    %3 = vector.load %arg4[%c0_5, %c0_6] : memref<8x1024xf32, #tpu.memory_space<vmem>>, vector<8x1024xf32>
    %4 = arith.mulf %1, %3 : vector<8x1024xf32>
    %5 = arith.addf %0, %4 : vector<8x1024xf32>
    %c0_7 = arith.constant 0 : index
    %c0_8 = arith.constant 0 : index
    %6 = vector.load %arg5[%c0_7, %c0_8] : memref<8x1024xf32, #tpu.memory_space<vmem>>, vector<8x1024xf32>
    tpu.vector_store %arg5[%c0_7, %c0_8], %5 {strides = array<i32>} : memref<8x1024xf32, #tpu.memory_space<vmem>>, vector<8x1024xf32>,
    %7 = tpu.reciprocal %1 : vector<8x1024xf32> -> vector<8x1024xf32>
    %8 = arith.subf %2, %0 : vector<8x1024xf32>
    %9 = arith.mulf %8, %7 : vector<8x1024xf32>
    %10 = arith.mulf %9, %9 : vector<8x1024xf32>
    %cst = arith.constant -5.000000e-01 : f32
    %11 = vector.broadcast %cst : f32 to vector<8x1024xf32>
    %12 = arith.mulf %11, %10 : vector<8x1024xf32>
    %13 = math.log %1 : vector<8x1024xf32>
    %14 = arith.subf %12, %13 : vector<8x1024xf32>
    %cst_9 = arith.constant 0.918938517 : f32
    %15 = vector.broadcast %cst_9 : f32 to vector<8x1024xf32>
    %16 = arith.subf %14, %15 : vector<8x1024xf32>
    %c0_10 = arith.constant 0 : index
    %c0_11 = arith.constant 0 : index
    %17 = vector.load %arg6[%c0_10, %c0_11] : memref<8x1024xf32, #tpu.memory_space<vmem>>, vector<8x1024xf32>
    tpu.vector_store %arg6[%c0_10, %c0_11], %16 {strides = array<i32>} : memref<8x1024xf32, #tpu.memory_space<vmem>>, vector<8x1024xf32>,
    return
  }
  func.func @transform_0(%arg0: i32) -> (i32, i32) {
    %c0_i32 = arith.constant 0 : i32
    %c0_i32_0 = arith.constant 0 : i32
    return %arg0, %c0_i32 : i32, i32
  }
  func.func @transform_1(%arg0: i32) -> (i32, i32) {
    %c0_i32 = arith.constant 0 : i32
    %c0_i32_0 = arith.constant 0 : i32
    return %arg0, %c0_i32 : i32, i32
  }
  func.func @transform_2(%arg0: i32) -> (i32, i32) {
    %c0_i32 = arith.constant 0 : i32
    %c0_i32_0 = arith.constant 0 : i32
    return %arg0, %c0_i32 : i32, i32
  }
  func.func @transform_3(%arg0: i32) -> (i32, i32) {
    %c0_i32 = arith.constant 0 : i32
    %c0_i32_0 = arith.constant 0 : i32
    return %arg0, %c0_i32 : i32, i32
  }
  func.func @transform_4(%arg0: i32) -> (i32, i32) {
    %c0_i32 = arith.constant 0 : i32
    %c0_i32_0 = arith.constant 0 : i32
    return %arg0, %c0_i32 : i32, i32
  }
  func.func @transform_5(%arg0: i32) -> (i32, i32) {
    %c0_i32 = arith.constant 0 : i32
    %c0_i32_0 = arith.constant 0 : i32
    return %arg0, %c0_i32 : i32, i32
  }
}

</mosaic_0001>

<llo_original>
// kernel: normal_sample_and_log_prob.1
$region0: #{normal_sample_and_log_prob.1}
  #allocation0 [shape = 'u32[]', space=smem, size = 0x4, offset = 0x4, fixed_abs, tag = 'smem constant byte address 0x4 - core index']
  #allocation1 [shape = 'u32[72,128]{1,0:T(1,128)}', space=vmem, size = 0x9000, scoped, tag = 'internal scratch']
  %s0 = inlined_call_operand.vmem [shape: f32[8,1024], index: 0, kind: input, shape index: {}]
  %s1 = inlined_call_operand.vmem [shape: f32[8,1024], index: 1, kind: input, shape index: {}]
  %s2 = inlined_call_operand.vmem [shape: f32[8,1024], index: 2, kind: input, shape index: {}]
  %s3 = inlined_call_operand.vmem [shape: f32[8,1024], index: 3, kind: input, shape index: {}]
  %s4 = inlined_call_operand.vmem [shape: f32[8,1024], index: 4, kind: output, shape index: {0}]
  %s5 = inlined_call_operand.vmem [shape: f32[8,1024], index: 5, kind: output, shape index: {1}]
  %6 = xla_tuple %s4, %s5
  %s7 = sld [smem:[#allocation0]]
  $region34: #{normal_sample_and_log_prob.1} parent=0
    _
  %s9 = ssub.s32 1, %s7
  %s10 = scalar_select 0, %s9, %s7
  // Predicated region
  $region2: #{normal_sample_and_log_prob.1} parent=0 // pred_check
    _
  $region3: #{normal_sample_and_log_prob.1} parent=0 // pred_check_branch
    %12 = sbr.rel (0) target = $region5
  $region4: #{normal_sample_and_log_prob.1} parent=0 // pred_region
    _
  $region5: #{normal_sample_and_log_prob.1} parent=0 // pred_fallthru
    _
  // Predicated region
  $region6: #{normal_sample_and_log_prob.1} parent=0 // pred_check
    _
  $region7: #{normal_sample_and_log_prob.1} parent=0 // pred_check_branch
    %14 = sbr.rel (0) target = $region9
  $region8: #{normal_sample_and_log_prob.1} parent=0 // pred_region
    _
  $region9: #{normal_sample_and_log_prob.1} parent=0 // pred_fallthru
    _
  // Predicated region
  $region10: #{normal_sample_and_log_prob.1} parent=0 // pred_check
    _
  $region11: #{normal_sample_and_log_prob.1} parent=0 // pred_check_branch
    %16 = sbr.rel (0) target = $region13
  $region12: #{normal_sample_and_log_prob.1} parent=0 // pred_region
    _
  $region13: #{normal_sample_and_log_prob.1} parent=0 // pred_fallthru
    _
  // Predicated region
  $region14: #{normal_sample_and_log_prob.1} parent=0 // pred_check
    _
  $region15: #{normal_sample_and_log_prob.1} parent=0 // pred_check_branch
    %18 = sbr.rel (0) target = $region17
  $region16: #{normal_sample_and_log_prob.1} parent=0 // pred_region
    _
  $region17: #{normal_sample_and_log_prob.1} parent=0 // pred_fallthru
    _
  %v19 = vld [vmem:[%s0] sm:$0xff]
  %v20 = vld [vmem:[%s0 + $0x8] sm:$0xff]
  %v21 = vld [vmem:[%s0 + $0x10] sm:$0xff]
  %v22 = vld [vmem:[%s0 + $0x18] sm:$0xff]
  %v23 = vld [vmem:[%s0 + $0x20] sm:$0xff]
  %v24 = vld [vmem:[%s0 + $0x28] sm:$0xff]
  %v25 = vld [vmem:[%s0 + $0x30] sm:$0xff]
  %v26 = vld [vmem:[%s0 + $0x38] sm:$0xff]
  %v27 = vld [vmem:[%s1] sm:$0xff]
  %v28 = vld [vmem:[%s1 + $0x8] sm:$0xff]
  %v29 = vld [vmem:[%s1 + $0x10] sm:$0xff]
  %v30 = vld [vmem:[%s1 + $0x18] sm:$0xff]
  %v31 = vld [vmem:[%s1 + $0x20] sm:$0xff]
  %v32 = vld [vmem:[%s1 + $0x28] sm:$0xff]
  %v33 = vld [vmem:[%s1 + $0x30] sm:$0xff]
  %v34 = vld [vmem:[%s1 + $0x38] sm:$0xff]
  %v35 = vld [vmem:[%s2] sm:$0xff]
  %v36 = vld [vmem:[%s2 + $0x8] sm:$0xff]
  %v37 = vld [vmem:[%s2 + $0x10] sm:$0xff]
  %v38 = vld [vmem:[%s2 + $0x18] sm:$0xff]
  %v39 = vld [vmem:[%s2 + $0x20] sm:$0xff]
  %v40 = vld [vmem:[%s2 + $0x28] sm:$0xff]
  %v41 = vld [vmem:[%s2 + $0x30] sm:$0xff]
  %v42 = vld [vmem:[%s2 + $0x38] sm:$0xff]
  %v43 = vld [vmem:[%s3] sm:$0xff]
  %v44 = vld [vmem:[%s3 + $0x8] sm:$0xff]
  %v45 = vld [vmem:[%s3 + $0x10] sm:$0xff]
  %v46 = vld [vmem:[%s3 + $0x18] sm:$0xff]
  %v47 = vld [vmem:[%s3 + $0x20] sm:$0xff]
  %v48 = vld [vmem:[%s3 + $0x28] sm:$0xff]
  %v49 = vld [vmem:[%s3 + $0x30] sm:$0xff]
  %v50 = vld [vmem:[%s3 + $0x38] sm:$0xff]
  %v51 = vmul.f32 %v27, %v43
  %v52 = vmul.f32 %v28, %v44
  %v53 = vmul.f32 %v29, %v45
  %v54 = vmul.f32 %v30, %v46
  %v55 = vmul.f32 %v31, %v47
  %v56 = vmul.f32 %v32, %v48
  %v57 = vmul.f32 %v33, %v49
  %v58 = vmul.f32 %v34, %v50
  %v59 = vadd.f32 %v19, %v51
  %v60 = vadd.f32 %v20, %v52
  %v61 = vadd.f32 %v21, %v53
  %v62 = vadd.f32 %v22, %v54
  %v63 = vadd.f32 %v23, %v55
  %v64 = vadd.f32 %v24, %v56
  %v65 = vadd.f32 %v25, %v57
  %v66 = vadd.f32 %v26, %v58
  %67 = vst [vmem:[%s4] sm:$0xff] %v59
  %68 = vst [vmem:[%s4 + $0x8] sm:$0xff] %v60
  %69 = vst [vmem:[%s4 + $0x10] sm:$0xff] %v61
  %70 = vst [vmem:[%s4 + $0x18] sm:$0xff] %v62
  %71 = vst [vmem:[%s4 + $0x20] sm:$0xff] %v63
  %72 = vst [vmem:[%s4 + $0x28] sm:$0xff] %v64
  %73 = vst [vmem:[%s4 + $0x30] sm:$0xff] %v65
  %74 = vst [vmem:[%s4 + $0x38] sm:$0xff] %v66
  %v75 = vrcp.pop %v27
  %v76 = vmul.f32 %v27, %v75
  %v77 = vsub.f32 1.0, %v76
  %v78 = vmul.f32 %v75, %v77
  %v79 = vadd.f32 %v75, %v78
  %vm80 = vweird.f32 %v27
  %vm81 = vweird.f32 %v75
  %vm82 = vmor %vm80, %vm81
  %v83 = vsel %vm82, %v75, %v79
  %v84 = vand.u32 2147483647, %v27
  %vm85 = vcmp.eq.f32.partialorder %v84, 8.507059e+37
  %v86 = vand.u32 %v27, 2147483648
  %v87 = vor.u32 1.1754944e-38, %v86
  %v88 = vsel %vm85, %v87, %v83
  %v89 = vrcp.pop %v28
  %v90 = vmul.f32 %v28, %v89
  %v91 = vsub.f32 1.0, %v90
  %v92 = vmul.f32 %v89, %v91
  %v93 = vadd.f32 %v89, %v92
  %vm94 = vweird.f32 %v28
  %vm95 = vweird.f32 %v89
  %vm96 = vmor %vm94, %vm95
  %v97 = vsel %vm96, %v89, %v93
  %v98 = vand.u32 2147483647, %v28
  %vm99 = vcmp.eq.f32.partialorder %v98, 8.507059e+37
  %v100 = vand.u32 %v28, 2147483648
  %v101 = vor.u32 1.1754944e-38, %v100
  %v102 = vsel %vm99, %v101, %v97
  %v103 = vrcp.pop %v29
  %v104 = vmul.f32 %v29, %v103
  %v105 = vsub.f32 1.0, %v104
  %v106 = vmul.f32 %v103, %v105
  %v107 = vadd.f32 %v103, %v106
  %vm108 = vweird.f32 %v29
  %vm109 = vweird.f32 %v103
  %vm110 = vmor %vm108, %vm109
  %v111 = vsel %vm110, %v103, %v107
  %v112 = vand.u32 2147483647, %v29
  %vm113 = vcmp.eq.f32.partialorder %v112, 8.507059e+37
  %v114 = vand.u32 %v29, 2147483648
  %v115 = vor.u32 1.1754944e-38, %v114
  %v116 = vsel %vm113, %v115, %v111
  %v117 = vrcp.pop %v30
  %v118 = vmul.f32 %v30, %v117
  %v119 = vsub.f32 1.0, %v118
  %v120 = vmul.f32 %v117, %v119
  %v121 = vadd.f32 %v117, %v120
  %vm122 = vweird.f32 %v30
  %vm123 = vweird.f32 %v117
  %vm124 = vmor %vm122, %vm123
  %v125 = vsel %vm124, %v117, %v121
  %v126 = vand.u32 2147483647, %v30
  %vm127 = vcmp.eq.f32.partialorder %v126, 8.507059e+37
  %v128 = vand.u32 %v30, 2147483648
  %v129 = vor.u32 1.1754944e-38, %v128
  %v130 = vsel %vm127, %v129, %v125
  %v131 = vrcp.pop %v31
  %v132 = vmul.f32 %v31, %v131
  %v133 = vsub.f32 1.0, %v132
  %v134 = vmul.f32 %v131, %v133
  %v135 = vadd.f32 %v131, %v134
  %vm136 = vweird.f32 %v31
  %vm137 = vweird.f32 %v131
  %vm138 = vmor %vm136, %vm137
  %v139 = vsel %vm138, %v131, %v135
  %v140 = vand.u32 2147483647, %v31
  %vm141 = vcmp.eq.f32.partialorder %v140, 8.507059e+37
  %v142 = vand.u32 %v31, 2147483648
  %v143 = vor.u32 1.1754944e-38, %v142
  %v144 = vsel %vm141, %v143, %v139
  %v145 = vrcp.pop %v32
  %v146 = vmul.f32 %v32, %v145
  %v147 = vsub.f32 1.0, %v146
  %v148 = vmul.f32 %v145, %v147
  %v149 = vadd.f32 %v145, %v148
  %vm150 = vweird.f32 %v32
  %vm151 = vweird.f32 %v145
  %vm152 = vmor %vm150, %vm151
  %v153 = vsel %vm152, %v145, %v149
  %v154 = vand.u32 2147483647, %v32
  %vm155 = vcmp.eq.f32.partialorder %v154, 8.507059e+37
  %v156 = vand.u32 %v32, 2147483648
  %v157 = vor.u32 1.1754944e-38, %v156
  %v158 = vsel %vm155, %v157, %v153
  %v159 = vrcp.pop %v33
  %v160 = vmul.f32 %v33, %v159
  %v161 = vsub.f32 1.0, %v160
  %v162 = vmul.f32 %v159, %v161
  %v163 = vadd.f32 %v159, %v162
  %vm164 = vweird.f32 %v33
  %vm165 = vweird.f32 %v159
  %vm166 = vmor %vm164, %vm165
  %v167 = vsel %vm166, %v159, %v163
  %v168 = vand.u32 2147483647, %v33
  %vm169 = vcmp.eq.f32.partialorder %v168, 8.507059e+37
  %v170 = vand.u32 %v33, 2147483648
  %v171 = vor.u32 1.1754944e-38, %v170
  %v172 = vsel %vm169, %v171, %v167
  %v173 = vrcp.pop %v34
  %v174 = vmul.f32 %v34, %v173
  %v175 = vsub.f32 1.0, %v174
  %v176 = vmul.f32 %v173, %v175
  %v177 = vadd.f32 %v173, %v176
  %vm178 = vweird.f32 %v34
  %vm179 = vweird.f32 %v173
  %vm180 = vmor %vm178, %vm179
  %v181 = vsel %vm180, %v173, %v177
  %v182 = vand.u32 2147483647, %v34
  %vm183 = vcmp.eq.f32.partialorder %v182, 8.507059e+37
  %v184 = vand.u32 %v34, 2147483648
  %v185 = vor.u32 1.1754944e-38, %v184
  %v186 = vsel %vm183, %v185, %v181
  %v187 = vsub.f32 %v35, %v19
  %v188 = vsub.f32 %v36, %v20
  %v189 = vsub.f32 %v37, %v21
  %v190 = vsub.f32 %v38, %v22
  %v191 = vsub.f32 %v39, %v23
  %v192 = vsub.f32 %v40, %v24
  %v193 = vsub.f32 %v41, %v25
  %v194 = vsub.f32 %v42, %v26
  %v195 = vmul.f32 %v187, %v88
  %v196 = vmul.f32 %v188, %v102
  %v197 = vmul.f32 %v189, %v116
  %v198 = vmul.f32 %v190, %v130
  %v199 = vmul.f32 %v191, %v144
  %v200 = vmul.f32 %v192, %v158
  %v201 = vmul.f32 %v193, %v172
  %v202 = vmul.f32 %v194, %v186
  %v203 = vmul.f32 %v195, %v195
  %v204 = vmul.f32 %v196, %v196
  %v205 = vmul.f32 %v197, %v197
  %v206 = vmul.f32 %v198, %v198
  %v207 = vmul.f32 %v199, %v199
  %v208 = vmul.f32 %v200, %v200
  %v209 = vmul.f32 %v201, %v201
  %v210 = vmul.f32 %v202, %v202
  %v211 = vmul.f32 %v203, -0.5
  %v212 = vmul.f32 %v204, -0.5
  %v213 = vmul.f32 %v205, -0.5
  %v214 = vmul.f32 %v206, -0.5
  %v215 = vmul.f32 %v207, -0.5
  %v216 = vmul.f32 %v208, -0.5
  %v217 = vmul.f32 %v209, -0.5
  %v218 = vmul.f32 %v210, -0.5
  %v219 = vlog2.pop %v27
  %v220 = vmul.f32 %v219, 0.6931472
  %v221 = vlog2.pop %v28
  %v222 = vmul.f32 %v221, 0.6931472
  %v223 = vlog2.pop %v29
  %v224 = vmul.f32 %v223, 0.6931472
  %v225 = vlog2.pop %v30
  %v226 = vmul.f32 %v225, 0.6931472
  %v227 = vlog2.pop %v31
  %v228 = vmul.f32 %v227, 0.6931472
  %v229 = vlog2.pop %v32
  %v230 = vmul.f32 %v229, 0.6931472
  %v231 = vlog2.pop %v33
  %v232 = vmul.f32 %v231, 0.6931472
  %v233 = vlog2.pop %v34
  %v234 = vmul.f32 %v233, 0.6931472
  %v235 = vsub.f32 %v211, %v220
  %v236 = vsub.f32 %v212, %v222
  %v237 = vsub.f32 %v213, %v224
  %v238 = vsub.f32 %v214, %v226
  %v239 = vsub.f32 %v215, %v228
  %v240 = vsub.f32 %v216, %v230
  %v241 = vsub.f32 %v217, %v232
  %v242 = vsub.f32 %v218, %v234
  %v243 = vsub.f32 %v235, 0.9189385
  %v244 = vsub.f32 %v236, 0.9189385
  %v245 = vsub.f32 %v237, 0.9189385
  %v246 = vsub.f32 %v238, 0.9189385
  %v247 = vsub.f32 %v239, 0.9189385
  %v248 = vsub.f32 %v240, 0.9189385
  %v249 = vsub.f32 %v241, 0.9189385
  %v250 = vsub.f32 %v242, 0.9189385
  %251 = vst [vmem:[%s5] sm:$0xff] %v243
  %252 = vst [vmem:[%s5 + $0x8] sm:$0xff] %v244
  %253 = vst [vmem:[%s5 + $0x10] sm:$0xff] %v245
  %254 = vst [vmem:[%s5 + $0x18] sm:$0xff] %v246
  %255 = vst [vmem:[%s5 + $0x20] sm:$0xff] %v247
  %256 = vst [vmem:[%s5 + $0x28] sm:$0xff] %v248
  %257 = vst [vmem:[%s5 + $0x30] sm:$0xff] %v249
  %258 = vst [vmem:[%s5 + $0x38] sm:$0xff] %v250
  // Predicated region
  $region18: #{normal_sample_and_log_prob.1} parent=0 // pred_check
    _
  $region19: #{normal_sample_and_log_prob.1} parent=0 // pred_check_branch
    %260 = sbr.rel (0) target = $region21
  $region20: #{normal_sample_and_log_prob.1} parent=0 // pred_region
    _
  $region21: #{normal_sample_and_log_prob.1} parent=0 // pred_fallthru
    _
  // Predicated region
  $region22: #{normal_sample_and_log_prob.1} parent=0 // pred_check
    _
  $region23: #{normal_sample_and_log_prob.1} parent=0 // pred_check_branch
    %262 = sbr.rel (0) target = $region25
  $region24: #{normal_sample_and_log_prob.1} parent=0 // pred_region
    _
  $region25: #{normal_sample_and_log_prob.1} parent=0 // pred_fallthru
    _
  // Predicated region
  $region26: #{normal_sample_and_log_prob.1} parent=0 // pred_check
    _
  $region27: #{normal_sample_and_log_prob.1} parent=0 // pred_check_branch
    %264 = sbr.rel (0) target = $region29
  $region28: #{normal_sample_and_log_prob.1} parent=0 // pred_region
    _
  $region29: #{normal_sample_and_log_prob.1} parent=0 // pred_fallthru
    _
  // Predicated region
  $region30: #{normal_sample_and_log_prob.1} parent=0 // pred_check
    _
  $region31: #{normal_sample_and_log_prob.1} parent=0 // pred_check_branch
    %266 = sbr.rel (0) target = $region33
  $region32: #{normal_sample_and_log_prob.1} parent=0 // pred_region
    _
  $region33: #{normal_sample_and_log_prob.1} parent=0 // pred_fallthru
    _

</llo_original>
